<compile_context>
chip_gen: v7x
topology: tpu7x:2x2x1
jax: 0.10.0
libtpu: 0.0.40
codegen_flags: <defaults>
</compile_context>

<pallas_src>
import functools
import math

import jax
import jax.numpy as jnp
from jax.experimental import pallas as pl
from jax.experimental.pallas import tpu as pltpu


# ----------------------------- config -----------------------------------
class Config:
    input_size = 32
    layers_size = 32
    n_hidden_layers = 2
    embedding_size = 16
    vocab_size = 128
    dropout = 0.1          # TODO(synk): dropout is treated as identity (eval mode)
    label_smoothing = 0.1


# ----------------------------- kernel ------------------------------------
def _content_loss_kernel(x_ref, bow_ref, w_ref, b_ref, out_ref, *,
                         label_smoothing, vocab_size):
    # single fused linear: logits = x @ W_eff + b_eff  (one MXU push)
    logits = jnp.dot(x_ref[...], w_ref[...],
                     preferred_element_type=jnp.float32) + b_ref[...]

    # nn.Softmax(dim=0): softmax over the BATCH axis, exactly as the torch module does
    m = jnp.max(logits, axis=0, keepdims=True)          # (1, V)
    z = logits - m                                       # (B, V)
    e = jnp.exp(z)                                       # (B, V)  EUP
    denom = jnp.sum(e, axis=0, keepdims=True)            # (1, V)
    inv_denom = pl.reciprocal(denom, approx=False)       # (1, V)
    preds = e * inv_denom                                # (B, V)
    log_denom = jnp.log(denom)                           # (1, V)  EUP, row only

    # label smoothing on the bag-of-words target
    smoothed = bow_ref[...] * (1.0 - label_smoothing) + label_smoothing / vocab_size

    # BCELoss (mean reduction); torch clamps each log term at -100
    log_p = jnp.maximum(z - log_denom, -100.0)            # log-softmax form of log(preds)
    log_1mp = jnp.maximum(jnp.log(1.0 - preds), -100.0)
    bce = -(smoothed * log_p + (1.0 - smoothed) * log_1mp)

    out_ref[0, 0] = jnp.mean(bce)


# ----------------------------- wrapper ------------------------------------
def content_model_loss(sentences, content_bow, params, *, label_smoothing, vocab_size):
    """params: flat list [W0, b0, W1, b1, ..., Wc, bc] with W as (in, out), b as (1, out)."""
    # Constant-fold the activation-free linear chain + classifier:
    #   W_eff = W0 @ W1 @ ... @ Wc
    #   b_eff = ((b0 @ W1 + b1) @ W2 + ...) @ Wc + bc
    ws, bs = params[0::2], params[1::2]
    w_eff, b_eff = ws[0], bs[0]
    for w, b in zip(ws[1:], bs[1:]):
        w_eff = jnp.dot(w_eff, w, preferred_element_type=jnp.float32)
        b_eff = jnp.dot(b_eff, w, preferred_element_type=jnp.float32) + b

    kernel = functools.partial(_content_loss_kernel,
                               label_smoothing=float(label_smoothing),
                               vocab_size=float(vocab_size))

    vmem = pltpu.MemorySpace.VMEM
    out = pl.pallas_call(
        kernel,
        out_shape=jax.ShapeDtypeStruct((1, 1), jnp.float32),
        # no grid: kernel runs once on whole (tiny) arrays resident in VMEM
        in_specs=[pl.BlockSpec(memory_space=vmem)] * 4,
        out_specs=pl.BlockSpec(memory_space=pltpu.MemorySpace.SMEM),
    )(sentences, content_bow, w_eff, b_eff)
    return out[0, 0]


# ----------------------------- param init ---------------------------------
def init_linear(key, fan_in, fan_out):
    """Deterministic torch-style init: U(-1/sqrt(fan_in), 1/sqrt(fan_in))."""
    kw, kb = jax.random.split(key)
    bound = 1.0 / math.sqrt(fan_in)
    w = jax.random.uniform(kw, (fan_in, fan_out), jnp.float32, -bound, bound)
    b = jax.random.uniform(kb, (1, fan_out), jnp.float32, -bound, bound)
    return w, b


def build_params(key, cfg):
    dims = [(cfg.input_size, cfg.layers_size)]
    dims += [(cfg.layers_size, cfg.layers_size)] * cfg.n_hidden_layers
    dims += [(cfg.layers_size, cfg.embedding_size)]
    dims += [(cfg.embedding_size, cfg.vocab_size)]   # content_classifier
    params = []
    for (fi, fo) in dims:
        key, sub = jax.random.split(key)
        w, b = init_linear(sub, fi, fo)
        params += [w, b]
    return params


# ----------------------------- main ---------------------------------------
if __name__ == "__main__":
    cfg = Config()
    batch = 8

    key = jax.random.PRNGKey(0)
    k_x, k_bow, k_params = jax.random.split(key, 3)

    sentences = jax.random.normal(k_x, (batch, cfg.input_size), jnp.float32)
    content_bow = (jax.random.uniform(k_bow, (batch, cfg.vocab_size)) > 0.5).astype(jnp.float32)

    params = build_params(k_params, cfg)

    loss_fn = jax.jit(functools.partial(
        content_model_loss,
        label_smoothing=cfg.label_smoothing,
        vocab_size=cfg.vocab_size,
    ))
    loss = loss_fn(sentences, content_bow, params)
    jax.block_until_ready(loss)

    # sanity: finite scalar
    assert jnp.isfinite(loss), f"non-finite loss: {loss}"
    print("KERNEL_OK")
</pallas_src>

<mosaic_0001>
module attributes {stable_mosaic.version = 11 : i64} {
  func.func @_content_loss_kernel(%arg0: memref<8x32xf32, #tpu.memory_space<vmem>>, %arg1: memref<8x128xf32, #tpu.memory_space<vmem>>, %arg2: memref<32x128xf32, #tpu.memory_space<vmem>>, %arg3: memref<1x128xf32, #tpu.memory_space<vmem>>, %arg4: memref<1x1xf32, #tpu.memory_space<smem>>) attributes {dimension_semantics = [], scalar_prefetch = 0 : i64, scratch_operands = 0 : i64, tpu.core_type = #tpu.core_type<tc>} {
    %c0 = arith.constant 0 : index
    %c0_0 = arith.constant 0 : index
    %0 = vector.load %arg0[%c0, %c0_0] : memref<8x32xf32, #tpu.memory_space<vmem>>, vector<8x32xf32>
    %c0_1 = arith.constant 0 : index
    %c0_2 = arith.constant 0 : index
    %1 = vector.load %arg2[%c0_1, %c0_2] : memref<32x128xf32, #tpu.memory_space<vmem>>, vector<32x128xf32>
    %cst = arith.constant dense<0.000000e+00> : vector<8x128xf32>
    %2 = tpu.matmul %0, %1, %cst {dimension_numbers = #tpu.dot_dimension_numbers<[1], [0], [0], [1], [0, 0, 1, 1], [], []>} : vector<8x32xf32>, vector<32x128xf32>, vector<8x128xf32> -> vector<8x128xf32>
    %c0_3 = arith.constant 0 : index
    %c0_4 = arith.constant 0 : index
    %3 = vector.load %arg3[%c0_3, %c0_4] : memref<1x128xf32, #tpu.memory_space<vmem>>, vector<1x128xf32>
    %4 = vector.broadcast %3 : vector<1x128xf32> to vector<8x128xf32>
    %5 = arith.addf %2, %4 : vector<8x128xf32>
    %cst_5 = arith.constant dense<0xFF800000> : vector<128xf32>
    %6 = vector.multi_reduction <maximumf>, %5, %cst_5 [0] : vector<8x128xf32> to vector<128xf32>
    %7 = vector.shape_cast %6 : vector<128xf32> to vector<1x128xf32>
    %8 = vector.broadcast %7 : vector<1x128xf32> to vector<8x128xf32>
    %9 = arith.subf %5, %8 : vector<8x128xf32>
    %10 = math.exp %9 : vector<8x128xf32>
    %cst_6 = arith.constant dense<0.000000e+00> : vector<128xf32>
    %11 = vector.multi_reduction <add>, %10, %cst_6 [0] : vector<8x128xf32> to vector<128xf32>
    %12 = vector.shape_cast %11 : vector<128xf32> to vector<1x128xf32>
    %13 = tpu.reciprocal %12 : vector<1x128xf32> -> vector<1x128xf32>
    %14 = vector.broadcast %13 : vector<1x128xf32> to vector<8x128xf32>
    %15 = arith.mulf %10, %14 : vector<8x128xf32>
    %16 = math.log %12 : vector<1x128xf32>
    %c0_7 = arith.constant 0 : index
    %c0_8 = arith.constant 0 : index
    %17 = vector.load %arg1[%c0_7, %c0_8] : memref<8x128xf32, #tpu.memory_space<vmem>>, vector<8x128xf32>
    %cst_9 = arith.constant 0.899999976 : f32
    %18 = vector.broadcast %cst_9 : f32 to vector<8x128xf32>
    %19 = arith.mulf %17, %18 : vector<8x128xf32>
    %cst_10 = arith.constant 7.812500e-04 : f32
    %20 = vector.broadcast %cst_10 : f32 to vector<8x128xf32>
    %21 = arith.addf %19, %20 : vector<8x128xf32>
    %22 = vector.broadcast %16 : vector<1x128xf32> to vector<8x128xf32>
    %23 = arith.subf %9, %22 : vector<8x128xf32>
    %cst_11 = arith.constant -1.000000e+02 : f32
    %24 = vector.broadcast %cst_11 : f32 to vector<8x128xf32>
    %25 = arith.maximumf %23, %24 : vector<8x128xf32>
    %cst_12 = arith.constant 1.000000e+00 : f32
    %26 = vector.broadcast %cst_12 : f32 to vector<8x128xf32>
    %27 = arith.subf %26, %15 : vector<8x128xf32>
    %28 = math.log %27 : vector<8x128xf32>
    %cst_13 = arith.constant -1.000000e+02 : f32
    %29 = vector.broadcast %cst_13 : f32 to vector<8x128xf32>
    %30 = arith.maximumf %28, %29 : vector<8x128xf32>
    %31 = arith.mulf %21, %25 : vector<8x128xf32>
    %cst_14 = arith.constant 1.000000e+00 : f32
    %32 = vector.broadcast %cst_14 : f32 to vector<8x128xf32>
    %33 = arith.subf %32, %21 : vector<8x128xf32>
    %34 = arith.mulf %33, %30 : vector<8x128xf32>
    %35 = arith.addf %31, %34 : vector<8x128xf32>
    %cst_15 = arith.constant 0.000000e+00 : f32
    %36 = vector.broadcast %cst_15 : f32 to vector<8x128xf32>
    %37 = arith.subf %36, %35 : vector<8x128xf32>
    %38 = vector.shape_cast %37 : vector<8x128xf32> to vector<1x8x128xf32>
    %cst_16 = arith.constant dense<0.000000e+00> : vector<1xf32>
    %39 = vector.multi_reduction <add>, %38, %cst_16 [1, 2] : vector<1x8x128xf32> to vector<1xf32>
    %40 = vector.shape_cast %39 : vector<1xf32> to vector<1x1x1xf32>
    %41 = vector.extract %40[0, 0, 0] : f32 from vector<1x1x1xf32>
    %cst_17 = arith.constant 1.024000e+03 : f32
    %42 = arith.divf %41, %cst_17 : f32
    %c0_18 = arith.constant 0 : index
    %c0_19 = arith.constant 0 : index
    %43 = memref.load %arg4[%c0_18, %c0_19] : memref<1x1xf32, #tpu.memory_space<smem>>
    memref.store %42, %arg4[%c0_18, %c0_19] : memref<1x1xf32, #tpu.memory_space<smem>>
    return
  }
}

</mosaic_0001>

<llo_original>
// kernel: content_model_loss.1
$region0: #{content_model_loss.1}
  #allocation0 [shape = 'u32[]', space=smem, size = 0x4, offset = 0x4, fixed_abs, tag = 'smem constant byte address 0x4 - core index']
  #allocation1 [shape = 'u32[144,128]{1,0:T(1,128)}', space=vmem, size = 0x12000, scoped, tag = 'internal scratch']
  %s0 = inlined_call_operand.vmem [shape: f32[8,32], index: 0, kind: input, shape index: {}]
  %s1 = inlined_call_operand.vmem [shape: f32[8,128], index: 1, kind: input, shape index: {}]
  %s2 = inlined_call_operand.vmem [shape: f32[32,128], index: 2, kind: input, shape index: {}]
  %s3 = inlined_call_operand.vmem [shape: f32[1,128], index: 3, kind: input, shape index: {}]
  %s4 = inlined_call_operand.hbm [shape: f32[1,1], index: 4, kind: output, shape index: {}]
  %s5 = sld [smem:[#allocation0]]
  $region26: #{content_model_loss.1} parent=0
    _
  %s7 = ssub.s32 1, %s5
  %s8 = scalar_select 0, %s7, %s5
  $region1: #{content_model_loss.1} parent=0
    #allocation2 [shape = 'u8[512]{0}', space=smem, size = 0x200, scoped, tag = 'output window, operand 0, single buffered']
    #allocation3 [shape = 's32[1]{0}', space=sflag, size = 0x4, scoped, tag = 'scoped memory for content_model_loss.1']
    %9 = vsyncpa [#allocation3], 0
    // Predicated region
    $region2: #{content_model_loss.1} parent=1 // pred_check
      _
    $region3: #{content_model_loss.1} parent=1 // pred_check_branch
      %11 = sbr.rel (0) target = $region5
    $region4: #{content_model_loss.1} parent=1 // pred_region
      _
    $region5: #{content_model_loss.1} parent=1 // pred_fallthru
      _
    // Predicated region
    $region6: #{content_model_loss.1} parent=1 // pred_check
      _
    $region7: #{content_model_loss.1} parent=1 // pred_check_branch
      %13 = sbr.rel (0) target = $region9
    $region8: #{content_model_loss.1} parent=1 // pred_region
      _
    $region9: #{content_model_loss.1} parent=1 // pred_fallthru
      _
    // Predicated region
    $region10: #{content_model_loss.1} parent=1 // pred_check
      _
    $region11: #{content_model_loss.1} parent=1 // pred_check_branch
      %15 = sbr.rel (0) target = $region13
    $region12: #{content_model_loss.1} parent=1 // pred_region
      _
    $region13: #{content_model_loss.1} parent=1 // pred_fallthru
      _
    // Predicated region
    $region14: #{content_model_loss.1} parent=1 // pred_check
      _
    $region15: #{content_model_loss.1} parent=1 // pred_check_branch
      %17 = sbr.rel (0) target = $region17
    $region16: #{content_model_loss.1} parent=1 // pred_region
      _
    $region17: #{content_model_loss.1} parent=1 // pred_fallthru
      _
    %v18 = vld [vmem:[%s0] sm:$0xff]
    %v19 = vld [vmem:[%s2] sm:$0xff]
    %v20 = vld [vmem:[%s2 + $0x8] sm:$0xff]
    %v21 = vld [vmem:[%s2 + $0x10] sm:$0xff]
    %v22 = vld [vmem:[%s2 + $0x18] sm:$0xff]
    %v23 = vld [vmem:[%s3] sm:$0x1]
    %v25 = vlaneseq
    %v26 = vshrl.u32 %v25, 7
    %v27 = vsub.s32 0, %v26
    %v28 = vrot.slane %v23, %v27
    %vm30 = vcmask 261120
    %v32 = vsel %vm30, %v18, 0
    %34 = vmatprep.subr.mxu0 0.0
    %35 = vmatpush1.msra.mxu0 %v19
    %36 = vmatprep.subr.mxu0 0.0
    %37 = vmatpush1.msra.mxu0 %v20
    %38 = vmatprep.subr.mxu0 0.0
    %39 = vmatpush1.msra.mxu0 %v21
    %40 = vmatprep.subr.mxu0 0.0
    %41 = vmatpush1.msra.mxu0 %v22
    %42 = vmatprep.subr.mxu0 0.0
    %43 = vmatpush1.msra.mxu0 0.0
    %44 = vmatprep.subr.mxu0 0.0
    %45 = vmatpush1.msra.mxu0 0.0
    %46 = vmatprep.subr.mxu0 0.0
    %47 = vmatpush1.msra.mxu0 0.0
    %48 = vmatprep.subr.mxu0 0.0
    %49 = vmatpush1.msra.mxu0 0.0
    %50 = vmatprep.subr.mxu0 0.0
    %51 = vmatpush1.msra.mxu0 0.0
    %52 = vmatprep.subr.mxu0 0.0
    %53 = vmatpush1.msra.mxu0 0.0
    %54 = vmatprep.subr.mxu0 0.0
    %55 = vmatpush1.msra.mxu0 0.0
    %56 = vmatprep.subr.mxu0 0.0
    %57 = vmatpush1.msra.mxu0 0.0
    %58 = vmatprep.subr.mxu0 0.0
    %59 = vmatpush1.msra.mxu0 0.0
    %60 = vmatprep.subr.mxu0 0.0
    %61 = vmatpush1.msra.mxu0 0.0
    %62 = vmatprep.subr.mxu0 0.0
    %63 = vmatpush1.msra.mxu0 0.0
    %64 = vmatprep.subr.mxu0 0.0
    %65 = vmatpush1.msra.mxu0 0.0
    %66 = vmatprep.subr.mxu0 0.0
    %67 = vmatpush1.msra.mxu0 0.0
    %68 = vmatprep.subr.mxu0 0.0
    %69 = vmatpush1.msra.mxu0 0.0
    %70 = vmatprep.subr.mxu0 0.0
    %71 = vmatpush1.msra.mxu0 0.0
    %72 = vmatprep.subr.mxu0 0.0
    %73 = vmatpush1.msra.mxu0 0.0
    %74 = vmatprep.subr.mxu0 0.0
    %75 = vmatpush1.msra.mxu0 0.0
    %76 = vmatprep.subr.mxu0 0.0
    %77 = vmatpush1.msra.mxu0 0.0
    %78 = vmatprep.subr.mxu0 0.0
    %79 = vmatpush1.msra.mxu0 0.0
    %80 = vmatprep.subr.mxu0 0.0
    %81 = vmatpush1.msra.mxu0 0.0
    %82 = vmatprep.subr.mxu0 0.0
    %83 = vmatpush1.msra.mxu0 0.0
    %84 = vmatprep.subr.mxu0 0.0
    %85 = vmatpush1.msra.mxu0 0.0
    %86 = vmatprep.subr.mxu0 0.0
    %87 = vmatpush1.msra.mxu0 0.0
    %88 = vmatprep.subr.mxu0 0.0
    %89 = vmatpush1.msra.mxu0 0.0
    %90 = vmatprep.subr.mxu0 0.0
    %91 = vmatpush1.msra.mxu0 0.0
    %92 = vmatprep.subr.mxu0 0.0
    %93 = vmatpush1.msra.mxu0 0.0
    %94 = vmatprep.subr.mxu0 0.0
    %95 = vmatpush1.msra.mxu0 0.0
    %96 = vmatprep.subr.mxu0 0.0
    %97 = vmatpush1.msra.mxu0 0.0
    %98 = vmatprep.mubr.f32.mxu0 0.0
    %99 = vmatmul.mubr.f32.gmra.mrb[0].mxu0 %v32
    %v100 = vpop.f32.mrb[0].mxu0
    %v101 = vadd.f32 %v28, %v100
    %v102 = vpop.f32.mrb[0].mxu0
    %103 = vdwg.mxu0
    %v104 = vrot.slane %v101, 4
    %v105 = vmax.f32 %v101, %v104
    %v106 = vrot.slane %v105, 2
    %v107 = vmax.f32 %v105, %v106
    %v108 = vrot.slane %v107, 1
    %v109 = vmax.f32 %v107, %v108
    %v110 = vsub.f32 %v101, %v109
    %v111 = vmul.f32 %v110, 1.442695
    %v112 = vpow.pop %v111
    %v113 = vrot.slane %v112, 4
    %v114 = vadd.f32 %v112, %v113
    %v115 = vrot.slane %v114, 2
    %v116 = vadd.f32 %v114, %v115
    %v117 = vrot.slane %v116, 1
    %v118 = vadd.f32 %v116, %v117
    %v119 = vrcp.pop %v118
    %v120 = vmul.f32 %v112, %v119
    %v121 = vlog2.pop %v118
    %v122 = vmul.f32 %v121, 0.6931472
    %v123 = vld [vmem:[%s1] sm:$0xff]
    %v124 = vmul.f32 %v123, 0.9
    %v125 = vadd.f32 %v124, 0.00078125
    %v126 = vsub.f32 %v110, %v122
    %v127 = vmax.f32 %v126, -100.0
    %v128 = vsub.f32 1.0, %v120
    %v129 = vlog2.pop %v128
    %v130 = vmul.f32 %v129, 0.6931472
    %v131 = vmax.f32 %v130, -100.0
    %v132 = vmul.f32 %v125, %v127
    %v133 = vsub.f32 1.0, %v125
    %v134 = vmul.f32 %v133, %v131
    %v135 = vadd.f32 %v132, %v134
    %v136 = vsub.f32 0.0, %v135
    %137 = vadd.xlane.f32.xlu0 %v136
    %v138 = vpop.xlane.xlu0 %137
    %v139 = vrot.slane %v138, 4
    %v140 = vadd.f32 %v138, %v139
    %v141 = vrot.slane %v140, 2
    %v142 = vadd.f32 %v140, %v141
    %v143 = vrot.slane %v142, 1
    %v144 = vadd.f32 %v142, %v143
    %s145 = vtos %v144
    %v146 = vrcp.pop 1024.0
    %s147 = vtos %v146
    %s148 = smul.f32 %s145, %s147
    %s149 = scalar_lea.smem [#allocation2], 0
    %150 = sst [smem:[%s149]] %s148
    // Predicated region
    $region18: #{content_model_loss.1} parent=1 // pred_check
      _
    $region19: #{content_model_loss.1} parent=1 // pred_check_branch
      %152 = sbr.rel (0) target = $region21
    $region20: #{content_model_loss.1} parent=1 // pred_region
      %s154 = ssub.s32 16, 16
      %155 = vsyncadd [#allocation3], %s154
      %158 = dma.smem_to_hbm [#allocation2], 16, %s4, [#allocation3]
    $region21: #{content_model_loss.1} parent=1 // pred_fallthru
      _
    // Predicated region
    $region22: #{content_model_loss.1} parent=1 // pred_check
      _
    $region23: #{content_model_loss.1} parent=1 // pred_check_branch
      %160 = sbr.rel (0) target = $region25
    $region24: #{content_model_loss.1} parent=1 // pred_region
      %161 = dma.done [#allocation3], 16
    $region25: #{content_model_loss.1} parent=1 // pred_fallthru
      _
    %162 = sfence
    %163 = vsyncpa [#allocation3], 1

</llo_original>
